<compile_context>
chip_gen: v7x
topology: tpu7x:2x2x1
jax: 0.10.0
libtpu: 0.0.40
codegen_flags: <defaults>
</compile_context>

<pallas_src>
import jax
import jax.numpy as jnp
from jax.experimental import pallas as pl
from jax.experimental.pallas import tpu as pltpu

_LANE = 128
_SMALL_BYTES = 512 * 1024            # below this, launch overhead > the copy itself
_TILE_BYTES_BUDGET = 6 * 1024 * 1024  # per-tile budget; x4 (in+out, double-buffered) ~ 24 MiB
_VMEM_LIMIT_BYTES = 32 * 1024 * 1024  # explicit scoped-VMEM limit, valid on v5e/v6e/v7x
_MIN_SPLIT_BYTES = 1 * 1024 * 1024    # only split a lone block (for v7x's 2nd TC) if halves stay >= 1 MiB


def _identity_kernel(x_ref, o_ref):
    # Template hot path: concrete subclasses drop their real compute here.
    o_ref[...] = x_ref[...]


def _sublane(dtype) -> int:
    """Minimum sublane granularity: sub-32-bit dtypes pack along sublanes."""
    bits = jnp.dtype(dtype).itemsize * 8
    if bits >= 32:
        return 8
    if bits == 16:
        return 16
    return 32


def _lane_dense_2d(shape, size):
    """Pick a lane-dense (rows, cols) 2-D view of the flattened state."""
    for cols in (2048, 1024, 512, 256, _LANE):
        if size % cols == 0:
            return size // cols, cols
    # Ragged total: keep the original last axis; full-extent blocks handle it.
    cols = shape[-1]
    return size // cols, cols


def base_nn_forward(state: jax.Array) -> jax.Array:
    """Pallas implementation of baseNN's (template) forward: identity on `state`."""
    orig_shape = state.shape
    dtype = state.dtype
    itemsize = jnp.dtype(dtype).itemsize
    nbytes = state.size * itemsize

    # Fast path: 0-d / tiny states.  The template forward is a pass-through, so
    # paying microseconds of kernel-launch cost for nanoseconds of copy is waste.
    if state.ndim == 0 or nbytes < _SMALL_BYTES:
        return state

    rows, cols = _lane_dense_2d(orig_shape, state.size)
    flat = state.reshape(rows, cols)
    sub = _sublane(dtype)

    # --- choose blocks against the VMEM budget (dtype-aware, lane-dense) ---
    if cols * sub * itemsize <= _TILE_BYTES_BUDGET:
        block_cols = cols                                  # full lane extent: widest stores
    else:
        block_cols = max(
            _LANE, (_TILE_BYTES_BUDGET // (sub * itemsize) // _LANE) * _LANE
        )

    max_rows = max(sub, _TILE_BYTES_BUDGET // (block_cols * itemsize))
    if rows <= max_rows:
        block_rows = rows                                  # full row extent (allowed by (8,128) rule)
    else:
        block_rows = max(sub, (max_rows // sub) * sub)

    grid_r = pl.cdiv(rows, block_rows)
    grid_c = pl.cdiv(cols, block_cols)

    # v7x has 2 TensorCores: keep >= 2 steps on the parallel row axis when the
    # resulting blocks stay comfortably above the per-step-overhead knee.
    if grid_r == 1 and (rows // 2) * block_cols * itemsize >= _MIN_SPLIT_BYTES:
        block_rows = max(sub, pl.cdiv(pl.cdiv(rows, 2), sub) * sub)
        grid_r = pl.cdiv(rows, block_rows)

    out_flat = pl.pallas_call(
        _identity_kernel,
        out_shape=jax.ShapeDtypeStruct((rows, cols), dtype),
        grid=(grid_r, grid_c),
        in_specs=[pl.BlockSpec((block_rows, block_cols), lambda i, j: (i, j))],
        out_specs=pl.BlockSpec((block_rows, block_cols), lambda i, j: (i, j)),
        input_output_aliases={0: 0},  # identity / in-place template: no 2nd HBM buffer when donated
        compiler_params=pltpu.CompilerParams(
            dimension_semantics=("parallel", "parallel"),
            vmem_limit_bytes=_VMEM_LIMIT_BYTES,
        ),
    )(flat)

    return out_flat.reshape(orig_shape)


if __name__ == "__main__":
    key = jax.random.PRNGKey(0)
    k1, k2, k3, k4 = jax.random.split(key, 4)

    # 1) Spec-sized NCHW state (batch=2, channels=4, spatial=16x16): tiny, takes
    #    the pass-through fast path (no kernel launch for 8 KiB of identity).
    x_small = jax.random.normal(k1, (2, 4, 16, 16), dtype=jnp.float32)
    y_small = jax.block_until_ready(base_nn_forward(x_small))
    assert y_small.shape == x_small.shape and y_small.dtype == x_small.dtype
    assert bool(jnp.allclose(y_small, x_small)), "fast-path identity mismatch"

    # 2) f32 state big enough for the Pallas path: lane-dense (128, 2048) view.
    x_f32 = jax.random.normal(k2, (2, 4, 64, 512), dtype=jnp.float32)
    y_f32 = jax.block_until_ready(base_nn_forward(x_f32))
    assert y_f32.shape == x_f32.shape and y_f32.dtype == x_f32.dtype
    assert bool(jnp.allclose(y_f32, x_f32)), "f32 kernel identity mismatch"

    # 3) bf16 state: exercises the dtype-aware (16-sublane) tiling.
    x_bf16 = jax.random.normal(k3, (2, 8, 48, 384), dtype=jnp.bfloat16)
    y_bf16 = jax.block_until_ready(base_nn_forward(x_bf16))
    assert y_bf16.shape == x_bf16.shape and y_bf16.dtype == x_bf16.dtype
    assert bool(jnp.array_equal(y_bf16, x_bf16)), "bf16 kernel identity mismatch"

    # 4) Ragged total (not a multiple of 128): full-extent blocks, no pad/slice.
    x_rag = jax.random.normal(k4, (3, 5, 72, 200), dtype=jnp.float32)
    y_rag = jax.block_until_ready(base_nn_forward(x_rag))
    assert y_rag.shape == x_rag.shape and y_rag.dtype == x_rag.dtype
    assert bool(jnp.allclose(y_rag, x_rag)), "ragged kernel identity mismatch"

    print("KERNEL_OK")
</pallas_src>

<mosaic_0001>
module attributes {stable_mosaic.version = 11 : i64} {
  func.func @_identity_kernel(%arg0: i32, %arg1: i32, %arg2: memref<128x2048xf32, #tpu.memory_space<vmem>>, %arg3: memref<128x2048xf32, #tpu.memory_space<vmem>>) attributes {dimension_semantics = [#tpu.dimension_semantics<parallel>, #tpu.dimension_semantics<parallel>], iteration_bounds = array<i64: 1, 1>, scalar_prefetch = 0 : i64, scratch_operands = 0 : i64, tpu.core_type = #tpu.core_type<tc>, window_params = [{transform_indices = @transform_0, window_bounds = array<i64: 128, 2048>}, {transform_indices = @transform_1, window_bounds = array<i64: 128, 2048>}]} {
    %c0 = arith.constant 0 : index
    %c0_0 = arith.constant 0 : index
    %0 = vector.load %arg2[%c0, %c0_0] : memref<128x2048xf32, #tpu.memory_space<vmem>>, vector<128x2048xf32>
    %c0_1 = arith.constant 0 : index
    %c0_2 = arith.constant 0 : index
    %1 = vector.load %arg3[%c0_1, %c0_2] : memref<128x2048xf32, #tpu.memory_space<vmem>>, vector<128x2048xf32>
    tpu.vector_store %arg3[%c0_1, %c0_2], %0 {strides = array<i32>} : memref<128x2048xf32, #tpu.memory_space<vmem>>, vector<128x2048xf32>,
    return
  }
  func.func @transform_0(%arg0: i32, %arg1: i32) -> (i32, i32) {
    %c0_i32 = arith.constant 0 : i32
    return %arg0, %arg1 : i32, i32
  }
  func.func @transform_1(%arg0: i32, %arg1: i32) -> (i32, i32) {
    %c0_i32 = arith.constant 0 : i32
    return %arg0, %arg1 : i32, i32
  }
}

</mosaic_0001>

<llo_original>
// kernel: tpu_custom_call.1
$region0: #{tpu_custom_call.1}
  #allocation0 [shape = 'u32[]', space=smem, size = 0x4, offset = 0x4, fixed_abs, tag = 'smem constant byte address 0x4 - core index']
  #allocation1 [shape = 'u32[144,128]{1,0:T(1,128)}', space=vmem, size = 0x12000, scoped, tag = 'internal scratch']
  %s0 = inlined_call_operand.hbm [shape: f32[128,2048], index: 0, kind: input, shape index: {}, may-alias: {0,1}]
  %s1 = inlined_call_operand.hbm [shape: f32[128,2048], index: 1, kind: output, shape index: {}, may-alias: {0,1}]
  %s2 = sld [smem:[#allocation0]]
  $region18: #{tpu_custom_call.1} parent=0
    _
  %s4 = ssub.s32 1, %s2
  %s5 = scalar_select 0, %s4, %s2
  $region1: #{tpu_custom_call.1} parent=0
    #allocation2 [shape = 'u8[1048576]{0}', space=vmem, size = 0x100000, scoped, tag = 'input window, operand 0, single buffered']
    #allocation3 [shape = 's32[1]{0}', space=sflag, size = 0x4, scoped, tag = 'scoped memory for tpu_custom_call.1']
    #allocation4 [shape = 's32[1]{0}', space=sflag, size = 0x4, scoped, tag = 'scoped memory for tpu_custom_call.1']
    #allocation5 [shape = 'u8[1048576]{0}', space=vmem, size = 0x100000, scoped, tag = 'output window, operand 0, single buffered']
    %6 = vsyncpa [#allocation3], 0
    %7 = vsyncpa [#allocation4], 0
    // Predicated region
    $region2: #{tpu_custom_call.1} parent=1 // pred_check
      _
    $region3: #{tpu_custom_call.1} parent=1 // pred_check_branch
      %9 = sbr.rel (0) target = $region5
    $region4: #{tpu_custom_call.1} parent=1 // pred_region
      %s11 = ssub.s32 32768, 32768
      %12 = vsyncadd [#allocation3], %s11
      %s13 = sshll.u32 [#allocation2], 4
      %s14 = int_to_ptr.vmem [resolvable:$true] %s13
      %19 = dma.hbm_to_vmem [thread:$0]  %s0, 32768, %s14, [#allocation3], 2048, 2048, 128
    $region5: #{tpu_custom_call.1} parent=1 // pred_fallthru
      _
    // Predicated region
    $region6: #{tpu_custom_call.1} parent=1 // pred_check
      _
    $region7: #{tpu_custom_call.1} parent=1 // pred_check_branch
      %21 = sbr.rel (0) target = $region9
    $region8: #{tpu_custom_call.1} parent=1 // pred_region
      %22 = dma.done [#allocation3], 32768
    $region9: #{tpu_custom_call.1} parent=1 // pred_fallthru
      _
    %v23 = vld [vmem:[#allocation2] sm:$0xff]
    %v24 = vld [vmem:[#allocation2 + $0x8] sm:$0xff]
    %v25 = vld [vmem:[#allocation2 + $0x10] sm:$0xff]
    %v26 = vld [vmem:[#allocation2 + $0x18] sm:$0xff]
    %v27 = vld [vmem:[#allocation2 + $0x20] sm:$0xff]
    %v28 = vld [vmem:[#allocation2 + $0x28] sm:$0xff]
    %v29 = vld [vmem:[#allocation2 + $0x30] sm:$0xff]
    %v30 = vld [vmem:[#allocation2 + $0x38] sm:$0xff]
    %v31 = vld [vmem:[#allocation2 + $0x40] sm:$0xff]
    %v32 = vld [vmem:[#allocation2 + $0x48] sm:$0xff]
    %v33 = vld [vmem:[#allocation2 + $0x50] sm:$0xff]
    %v34 = vld [vmem:[#allocation2 + $0x58] sm:$0xff]
    %v35 = vld [vmem:[#allocation2 + $0x60] sm:$0xff]
    %v36 = vld [vmem:[#allocation2 + $0x68] sm:$0xff]
    %v37 = vld [vmem:[#allocation2 + $0x70] sm:$0xff]
    %v38 = vld [vmem:[#allocation2 + $0x78] sm:$0xff]
    %v39 = vld [vmem:[#allocation2 + $0x80] sm:$0xff]
    %v40 = vld [vmem:[#allocation2 + $0x88] sm:$0xff]
    %v41 = vld [vmem:[#allocation2 + $0x90] sm:$0xff]
    %v42 = vld [vmem:[#allocation2 + $0x98] sm:$0xff]
    %v43 = vld [vmem:[#allocation2 + $0xa0] sm:$0xff]
    %v44 = vld [vmem:[#allocation2 + $0xa8] sm:$0xff]
    %v45 = vld [vmem:[#allocation2 + $0xb0] sm:$0xff]
    %v46 = vld [vmem:[#allocation2 + $0xb8] sm:$0xff]
    %v47 = vld [vmem:[#allocation2 + $0xc0] sm:$0xff]
    %v48 = vld [vmem:[#allocation2 + $0xc8] sm:$0xff]
    %v49 = vld [vmem:[#allocation2 + $0xd0] sm:$0xff]
    %v50 = vld [vmem:[#allocation2 + $0xd8] sm:$0xff]
    %v51 = vld [vmem:[#allocation2 + $0xe0] sm:$0xff]
    %v52 = vld [vmem:[#allocation2 + $0xe8] sm:$0xff]
    %v53 = vld [vmem:[#allocation2 + $0xf0] sm:$0xff]
    %v54 = vld [vmem:[#allocation2 + $0xf8] sm:$0xff]
    %v55 = vld [vmem:[#allocation2 + $0x100] sm:$0xff]
    %v56 = vld [vmem:[#allocation2 + $0x108] sm:$0xff]
    %v57 = vld [vmem:[#allocation2 + $0x110] sm:$0xff]
    %v58 = vld [vmem:[#allocation2 + $0x118] sm:$0xff]
    %v59 = vld [vmem:[#allocation2 + $0x120] sm:$0xff]
    %v60 = vld [vmem:[#allocation2 + $0x128] sm:$0xff]
    %v61 = vld [vmem:[#allocation2 + $0x130] sm:$0xff]
    %v62 = vld [vmem:[#allocation2 + $0x138] sm:$0xff]
    %v63 = vld [vmem:[#allocation2 + $0x140] sm:$0xff]
    %v64 = vld [vmem:[#allocation2 + $0x148] sm:$0xff]
    %v65 = vld [vmem:[#allocation2 + $0x150] sm:$0xff]
    %v66 = vld [vmem:[#allocation2 + $0x158] sm:$0xff]
    %v67 = vld [vmem:[#allocation2 + $0x160] sm:$0xff]
    %v68 = vld [vmem:[#allocation2 + $0x168] sm:$0xff]
    %v69 = vld [vmem:[#allocation2 + $0x170] sm:$0xff]
    %v70 = vld [vmem:[#allocation2 + $0x178] sm:$0xff]
    %v71 = vld [vmem:[#allocation2 + $0x180] sm:$0xff]
    %v72 = vld [vmem:[#allocation2 + $0x188] sm:$0xff]
    %v73 = vld [vmem:[#allocation2 + $0x190] sm:$0xff]
    %v74 = vld [vmem:[#allocation2 + $0x198] sm:$0xff]
    %v75 = vld [vmem:[#allocation2 + $0x1a0] sm:$0xff]
    %v76 = vld [vmem:[#allocation2 + $0x1a8] sm:$0xff]
    %v77 = vld [vmem:[#allocation2 + $0x1b0] sm:$0xff]
    %v78 = vld [vmem:[#allocation2 + $0x1b8] sm:$0xff]
    %v79 = vld [vmem:[#allocation2 + $0x1c0] sm:$0xff]
    %v80 = vld [vmem:[#allocation2 + $0x1c8] sm:$0xff]
    %v81 = vld [vmem:[#allocation2 + $0x1d0] sm:$0xff]
    %v82 = vld [vmem:[#allocation2 + $0x1d8] sm:$0xff]
    %v83 = vld [vmem:[#allocation2 + $0x1e0] sm:$0xff]
    %v84 = vld [vmem:[#allocation2 + $0x1e8] sm:$0xff]
    %v85 = vld [vmem:[#allocation2 + $0x1f0] sm:$0xff]
    %v86 = vld [vmem:[#allocation2 + $0x1f8] sm:$0xff]
    %v87 = vld [vmem:[#allocation2 + $0x200] sm:$0xff]
    %v88 = vld [vmem:[#allocation2 + $0x208] sm:$0xff]
    %v89 = vld [vmem:[#allocation2 + $0x210] sm:$0xff]
    %v90 = vld [vmem:[#allocation2 + $0x218] sm:$0xff]
    %v91 = vld [vmem:[#allocation2 + $0x220] sm:$0xff]
    %v92 = vld [vmem:[#allocation2 + $0x228] sm:$0xff]
    %v93 = vld [vmem:[#allocation2 + $0x230] sm:$0xff]
    %v94 = vld [vmem:[#allocation2 + $0x238] sm:$0xff]
    %v95 = vld [vmem:[#allocation2 + $0x240] sm:$0xff]
    %v96 = vld [vmem:[#allocation2 + $0x248] sm:$0xff]
    %v97 = vld [vmem:[#allocation2 + $0x250] sm:$0xff]
    %v98 = vld [vmem:[#allocation2 + $0x258] sm:$0xff]
    %v99 = vld [vmem:[#allocation2 + $0x260] sm:$0xff]
    %v100 = vld [vmem:[#allocation2 + $0x268] sm:$0xff]
    %v101 = vld [vmem:[#allocation2 + $0x270] sm:$0xff]
    %v102 = vld [vmem:[#allocation2 + $0x278] sm:$0xff]
    %v103 = vld [vmem:[#allocation2 + $0x280] sm:$0xff]
    %v104 = vld [vmem:[#allocation2 + $0x288] sm:$0xff]
    %v105 = vld [vmem:[#allocation2 + $0x290] sm:$0xff]
    %v106 = vld [vmem:[#allocation2 + $0x298] sm:$0xff]
    %v107 = vld [vmem:[#allocation2 + $0x2a0] sm:$0xff]
    %v108 = vld [vmem:[#allocation2 + $0x2a8] sm:$0xff]
    %v109 = vld [vmem:[#allocation2 + $0x2b0] sm:$0xff]
    %v110 = vld [vmem:[#allocation2 + $0x2b8] sm:$0xff]
    %v111 = vld [vmem:[#allocation2 + $0x2c0] sm:$0xff]
    %v112 = vld [vmem:[#allocation2 + $0x2c8] sm:$0xff]
    %v113 = vld [vmem:[#allocation2 + $0x2d0] sm:$0xff]
    %v114 = vld [vmem:[#allocation2 + $0x2d8] sm:$0xff]
    %v115 = vld [vmem:[#allocation2 + $0x2e0] sm:$0xff]
    %v116 = vld [vmem:[#allocation2 + $0x2e8] sm:$0xff]
    %v117 = vld [vmem:[#allocation2 + $0x2f0] sm:$0xff]
    %v118 = vld [vmem:[#allocation2 + $0x2f8] sm:$0xff]
    %v119 = vld [vmem:[#allocation2 + $0x300] sm:$0xff]
    %v120 = vld [vmem:[#allocation2 + $0x308] sm:$0xff]
    %v121 = vld [vmem:[#allocation2 + $0x310] sm:$0xff]
    %v122 = vld [vmem:[#allocation2 + $0x318] sm:$0xff]
    %v123 = vld [vmem:[#allocation2 + $0x320] sm:$0xff]
    %v124 = vld [vmem:[#allocation2 + $0x328] sm:$0xff]
    %v125 = vld [vmem:[#allocation2 + $0x330] sm:$0xff]
    %v126 = vld [vmem:[#allocation2 + $0x338] sm:$0xff]
    %v127 = vld [vmem:[#allocation2 + $0x340] sm:$0xff]
    %v128 = vld [vmem:[#allocation2 + $0x348] sm:$0xff]
    %v129 = vld [vmem:[#allocation2 + $0x350] sm:$0xff]
    %v130 = vld [vmem:[#allocation2 + $0x358] sm:$0xff]
    %v131 = vld [vmem:[#allocation2 + $0x360] sm:$0xff]
    %v132 = vld [vmem:[#allocation2 + $0x368] sm:$0xff]
    %v133 = vld [vmem:[#allocation2 + $0x370] sm:$0xff]
    %v134 = vld [vmem:[#allocation2 + $0x378] sm:$0xff]
    %v135 = vld [vmem:[#allocation2 + $0x380] sm:$0xff]
    %v136 = vld [vmem:[#allocation2 + $0x388] sm:$0xff]
    %v137 = vld [vmem:[#allocation2 + $0x390] sm:$0xff]
    %v138 = vld [vmem:[#allocation2 + $0x398] sm:$0xff]
    %v139 = vld [vmem:[#allocation2 + $0x3a0] sm:$0xff]
    %v140 = vld [vmem:[#allocation2 + $0x3a8] sm:$0xff]
    %v141 = vld [vmem:[#allocation2 + $0x3b0] sm:$0xff]
    %v142 = vld [vmem:[#allocation2 + $0x3b8] sm:$0xff]
    %v143 = vld [vmem:[#allocation2 + $0x3c0] sm:$0xff]
    %v144 = vld [vmem:[#allocation2 + $0x3c8] sm:$0xff]
    %v145 = vld [vmem:[#allocation2 + $0x3d0] sm:$0xff]
    %v146 = vld [vmem:[#allocation2 + $0x3d8] sm:$0xff]
    %v147 = vld [vmem:[#allocation2 + $0x3e0] sm:$0xff]
    %v148 = vld [vmem:[#allocation2 + $0x3e8] sm:$0xff]
    %v149 = vld [vmem:[#allocation2 + $0x3f0] sm:$0xff]
    %v150 = vld [vmem:[#allocation2 + $0x3f8] sm:$0xff]
    %v151 = vld [vmem:[#allocation2 + $0x400] sm:$0xff]
    %v152 = vld [vmem:[#allocation2 + $0x408] sm:$0xff]
    %v153 = vld [vmem:[#allocation2 + $0x410] sm:$0xff]
    %v154 = vld [vmem:[#allocation2 + $0x418] sm:$0xff]
    %v155 = vld [vmem:[#allocation2 + $0x420] sm:$0xff]
    %v156 = vld [vmem:[#allocation2 + $0x428] sm:$0xff]
    %v157 = vld [vmem:[#allocation2 + $0x430] sm:$0xff]
    %v158 = vld [vmem:[#allocation2 + $0x438] sm:$0xff]
    %v159 = vld [vmem:[#allocation2 + $0x440] sm:$0xff]
    %v160 = vld [vmem:[#allocation2 + $0x448] sm:$0xff]
    %v161 = vld [vmem:[#allocation2 + $0x450] sm:$0xff]
    %v162 = vld [vmem:[#allocation2 + $0x458] sm:$0xff]
    %v163 = vld [vmem:[#allocation2 + $0x460] sm:$0xff]
    %v164 = vld [vmem:[#allocation2 + $0x468] sm:$0xff]
    %v165 = vld [vmem:[#allocation2 + $0x470] sm:$0xff]
    %v166 = vld [vmem:[#allocation2 + $0x478] sm:$0xff]
    %v167 = vld [vmem:[#allocation2 + $0x480] sm:$0xff]
    %v168 = vld [vmem:[#allocation2 + $0x488] sm:$0xff]
    %v169 = vld [vmem:[#allocation2 + $0x490] sm:$0xff]
    %v170 = vld [vmem:[#allocation2 + $0x498] sm:$0xff]
    %v171 = vld [vmem:[#allocation2 + $0x4a0] sm:$0xff]
    %v172 = vld [vmem:[#allocation2 + $0x4a8] sm:$0xff]
    %v173 = vld [vmem:[#allocation2 + $0x4b0] sm:$0xff]
    %v174 = vld [vmem:[#allocation2 + $0x4b8] sm:$0xff]
    %v175 = vld [vmem:[#allocation2 + $0x4c0] sm:$0xff]
    %v176 = vld [vmem:[#allocation2 + $0x4c8] sm:$0xff]
    %v177 = vld [vmem:[#allocation2 + $0x4d0] sm:$0xff]
    %v178 = vld [vmem:[#allocation2 + $0x4d8] sm:$0xff]
    %v179 = vld [vmem:[#allocation2 + $0x4e0] sm:$0xff]
    %v180 = vld [vmem:[#allocation2 + $0x4e8] sm:$0xff]
    %v181 = vld [vmem:[#allocation2 + $0x4f0] sm:$0xff]
    %v182 = vld [vmem:[#allocation2 + $0x4f8] sm:$0xff]
    %v183 = vld [vmem:[#allocation2 + $0x500] sm:$0xff]
    %v184 = vld [vmem:[#allocation2 + $0x508] sm:$0xff]
    %v185 = vld [vmem:[#allocation2 + $0x510] sm:$0xff]
    %v186 = vld [vmem:[#allocation2 + $0x518] sm:$0xff]
    %v187 = vld [vmem:[#allocation2 + $0x520] sm:$0xff]
    %v188 = vld [vmem:[#allocation2 + $0x528] sm:$0xff]
    %v189 = vld [vmem:[#allocation2 + $0x530] sm:$0xff]
    %v190 = vld [vmem:[#allocation2 + $0x538] sm:$0xff]
    %v191 = vld [vmem:[#allocation2 + $0x540] sm:$0xff]
    %v192 = vld [vmem:[#allocation2 + $0x548] sm:$0xff]
    %v193 = vld [vmem:[#allocation2 + $0x550] sm:$0xff]
    %v194 = vld [vmem:[#allocation2 + $0x558] sm:$0xff]
    %v195 = vld [vmem:[#allocation2 + $0x560] sm:$0xff]
    %v196 = vld [vmem:[#allocation2 + $0x568] sm:$0xff]
    %v197 = vld [vmem:[#allocation2 + $0x570] sm:$0xff]
    %v198 = vld [vmem:[#allocation2 + $0x578] sm:$0xff]
    %v199 = vld [vmem:[#allocation2 + $0x580] sm:$0xff]
    %v200 = vld [vmem:[#allocation2 + $0x588] sm:$0xff]
    %v201 = vld [vmem:[#allocation2 + $0x590] sm:$0xff]
    %v202 = vld [vmem:[#allocation2 + $0x598] sm:$0xff]
    %v203 = vld [vmem:[#allocation2 + $0x5a0] sm:$0xff]
    %v204 = vld [vmem:[#allocation2 + $0x5a8] sm:$0xff]
    %v205 = vld [vmem:[#allocation2 + $0x5b0] sm:$0xff]
    %v206 = vld [vmem:[#allocation2 + $0x5b8] sm:$0xff]
    %v207 = vld [vmem:[#allocation2 + $0x5c0] sm:$0xff]
    %v208 = vld [vmem:[#allocation2 + $0x5c8] sm:$0xff]
    %v209 = vld [vmem:[#allocation2 + $0x5d0] sm:$0xff]
    %v210 = vld [vmem:[#allocation2 + $0x5d8] sm:$0xff]
    %v211 = vld [vmem:[#allocation2 + $0x5e0] sm:$0xff]
    %v212 = vld [vmem:[#allocation2 + $0x5e8] sm:$0xff]
    %v213 = vld [vmem:[#allocation2 + $0x5f0] sm:$0xff]
    %v214 = vld [vmem:[#allocation2 + $0x5f8] sm:$0xff]
    %v215 = vld [vmem:[#allocation2 + $0x600] sm:$0xff]
    %v216 = vld [vmem:[#allocation2 + $0x608] sm:$0xff]
    %v217 = vld [vmem:[#allocation2 + $0x610] sm:$0xff]
    %v218 = vld [vmem:[#allocation2 + $0x618] sm:$0xff]
    %v219 = vld [vmem:[#allocation2 + $0x620] sm:$0xff]
    %v220 = vld [vmem:[#allocation2 + $0x628] sm:$0xff]
    %v221 = vld [vmem:[#allocation2 + $0x630] sm:$0xff]
    %v222 = vld [vmem:[#allocation2 + $0x638] sm:$0xff]
    %v223 = vld [vmem:[#allocation2 + $0x640] sm:$0xff]
    %v224 = vld [vmem:[#allocation2 + $0x648] sm:$0xff]
    %v225 = vld [vmem:[#allocation2 + $0x650] sm:$0xff]
    %v226 = vld [vmem:[#allocation2 + $0x658] sm:$0xff]
    %v227 = vld [vmem:[#allocation2 + $0x660] sm:$0xff]
    %v228 = vld [vmem:[#allocation2 + $0x668] sm:$0xff]
    %v229 = vld [vmem:[#allocation2 + $0x670] sm:$0xff]
    %v230 = vld [vmem:[#allocation2 + $0x678] sm:$0xff]
    %v231 = vld [vmem:[#allocation2 + $0x680] sm:$0xff]
    %v232 = vld [vmem:[#allocation2 + $0x688] sm:$0xff]
    %v233 = vld [vmem:[#allocation2 + $0x690] sm:$0xff]
    %v234 = vld [vmem:[#allocation2 + $0x698] sm:$0xff]
    %v235 = vld [vmem:[#allocation2 + $0x6a0] sm:$0xff]
    %v236 = vld [vmem:[#allocation2 + $0x6a8] sm:$0xff]
    %v237 = vld [vmem:[#allocation2 + $0x6b0] sm:$0xff]
    %v238 = vld [vmem:[#allocation2 + $0x6b8] sm:$0xff]
    %v239 = vld [vmem:[#allocation2 + $0x6c0] sm:$0xff]
    %v240 = vld [vmem:[#allocation2 + $0x6c8] sm:$0xff]
    %v241 = vld [vmem:[#allocation2 + $0x6d0] sm:$0xff]
    %v242 = vld [vmem:[#allocation2 + $0x6d8] sm:$0xff]
    %v243 = vld [vmem:[#allocation2 + $0x6e0] sm:$0xff]
    %v244 = vld [vmem:[#allocation2 + $0x6e8] sm:$0xff]
    %v245 = vld [vmem:[#allocation2 + $0x6f0] sm:$0xff]
    %v246 = vld [vmem:[#allocation2 + $0x6f8] sm:$0xff]
    %v247 = vld [vmem:[#allocation2 + $0x700] sm:$0xff]
    %v248 = vld [vmem:[#allocation2 + $0x708] sm:$0xff]
    %v249 = vld [vmem:[#allocation2 + $0x710] sm:$0xff]
    %v250 = vld [vmem:[#allocation2 + $0x718] sm:$0xff]
    %v251 = vld [vmem:[#allocation2 + $0x720] sm:$0xff]
    %v252 = vld [vmem:[#allocation2 + $0x728] sm:$0xff]
    %v253 = vld [vmem:[#allocation2 + $0x730] sm:$0xff]
    %v254 = vld [vmem:[#allocation2 + $0x738] sm:$0xff]
    %v255 = vld [vmem:[#allocation2 + $0x740] sm:$0xff]
    %v256 = vld [vmem:[#allocation2 + $0x748] sm:$0xff]
    %v257 = vld [vmem:[#allocation2 + $0x750] sm:$0xff]
    %v258 = vld [vmem:[#allocation2 + $0x758] sm:$0xff]
    %v259 = vld [vmem:[#allocation2 + $0x760] sm:$0xff]
    %v260 = vld [vmem:[#allocation2 + $0x768] sm:$0xff]
    %v261 = vld [vmem:[#allocation2 + $0x770] sm:$0xff]
    %v262 = vld [vmem:[#allocation2 + $0x778] sm:$0xff]
    %v263 = vld [vmem:[#allocation2 + $0x780] sm:$0xff]
    %v264 = vld [vmem:[#allocation2 + $0x788] sm:$0xff]
    %v265 = vld [vmem:[#allocation2 + $0x790] sm:$0xff]
    %v266 = vld [vmem:[#allocation2 + $0x798] sm:$0xff]
    %v267 = vld [vmem:[#allocation2 + $0x7a0] sm:$0xff]
    %v268 = vld [vmem:[#allocation2 + $0x7a8] sm:$0xff]
    %v269 = vld [vmem:[#allocation2 + $0x7b0] sm:$0xff]
    %v270 = vld [vmem:[#allocation2 + $0x7b8] sm:$0xff]
    %v271 = vld [vmem:[#allocation2 + $0x7c0] sm:$0xff]
    %v272 = vld [vmem:[#allocation2 + $0x7c8] sm:$0xff]
    %v273 = vld [vmem:[#allocation2 + $0x7d0] sm:$0xff]
    %v274 = vld [vmem:[#allocation2 + $0x7d8] sm:$0xff]
    %v275 = vld [vmem:[#allocation2 + $0x7e0] sm:$0xff]
    %v276 = vld [vmem:[#allocation2 + $0x7e8] sm:$0xff]
    %v277 = vld [vmem:[#allocation2 + $0x7f0] sm:$0xff]
    %v278 = vld [vmem:[#allocation2 + $0x7f8] sm:$0xff]
    %279 = vst [vmem:[#allocation5] sm:$0xff] %v23
    %280 = vst [vmem:[#allocation5 + $0x8] sm:$0xff] %v24
    %281 = vst [vmem:[#allocation5 + $0x10] sm:$0xff] %v25
    %282 = vst [vmem:[#allocation5 + $0x18] sm:$0xff] %v26
    %283 = vst [vmem:[#allocation5 + $0x20] sm:$0xff] %v27
    %284 = vst [vmem:[#allocation5 + $0x28] sm:$0xff] %v28
    %285 = vst [vmem:[#allocation5 + $0x30] sm:$0xff] %v29
    %286 = vst [vmem:[#allocation5 + $0x38] sm:$0xff] %v30
    %287 = vst [vmem:[#allocation5 + $0x40] sm:$0xff] %v31
    %288 = vst [vmem:[#allocation5 + $0x48] sm:$0xff] %v32
    %289 = vst [vmem:[#allocation5 + $0x50] sm:$0xff] %v33
    %290 = vst [vmem:[#allocation5 + $0x58] sm:$0xff] %v34
    %291 = vst [vmem:[#allocation5 + $0x60] sm:$0xff] %v35
    %292 = vst [vmem:[#allocation5 + $0x68] sm:$0xff] %v36
    %293 = vst [vmem:[#allocation5 + $0x70] sm:$0xff] %v37
    %294 = vst [vmem:[#allocation5 + $0x78] sm:$0xff] %v38
    %295 = vst [vmem:[#allocation5 + $0x80] sm:$0xff] %v39
    %296 = vst [vmem:[#allocation5 + $0x88] sm:$0xff] %v40
    %297 = vst [vmem:[#allocation5 + $0x90] sm:$0xff] %v41
    %298 = vst [vmem:[#allocation5 + $0x98] sm:$0xff] %v42
    %299 = vst [vmem:[#allocation5 + $0xa0] sm:$0xff] %v43
    %300 = vst [vmem:[#allocation5 + $0xa8] sm:$0xff] %v44
    %301 = vst [vmem:[#allocation5 + $0xb0] sm:$0xff] %v45
    %302 = vst [vmem:[#allocation5 + $0xb8] sm:$0xff] %v46
    %303 = vst [vmem:[#allocation5 + $0xc0] sm:$0xff] %v47
    %304 = vst [vmem:[#allocation5 + $0xc8] sm:$0xff] %v48
    %305 = vst [vmem:[#allocation5 + $0xd0] sm:$0xff] %v49
    %306 = vst [vmem:[#allocation5 + $0xd8] sm:$0xff] %v50
    %307 = vst [vmem:[#allocation5 + $0xe0] sm:$0xff] %v51
    %308 = vst [vmem:[#allocation5 + $0xe8] sm:$0xff] %v52
    %309 = vst [vmem:[#allocation5 + $0xf0] sm:$0xff] %v53
    %310 = vst [vmem:[#allocation5 + $0xf8] sm:$0xff] %v54
    %311 = vst [vmem:[#allocation5 + $0x100] sm:$0xff] %v55
    %312 = vst [vmem:[#allocation5 + $0x108] sm:$0xff] %v56
    %313 = vst [vmem:[#allocation5 + $0x110] sm:$0xff] %v57
    %314 = vst [vmem:[#allocation5 + $0x118] sm:$0xff] %v58
    %315 = vst [vmem:[#allocation5 + $0x120] sm:$0xff] %v59
    %316 = vst [vmem:[#allocation5 + $0x128] sm:$0xff] %v60
    %317 = vst [vmem:[#allocation5 + $0x130] sm:$0xff] %v61
    %318 = vst [vmem:[#allocation5 + $0x138] sm:$0xff] %v62
    %319 = vst [vmem:[#allocation5 + $0x140] sm:$0xff] %v63
    %320 = vst [vmem:[#allocation5 + $0x148] sm:$0xff] %v64
    %321 = vst [vmem:[#allocation5 + $0x150] sm:$0xff] %v65
    %322 = vst [vmem:[#allocation5 + $0x158] sm:$0xff] %v66
    %323 = vst [vmem:[#allocation5 + $0x160] sm:$0xff] %v67
    %324 = vst [vmem:[#allocation5 + $0x168] sm:$0xff] %v68
    %325 = vst [vmem:[#allocation5 + $0x170] sm:$0xff] %v69
    %326 = vst [vmem:[#allocation5 + $0x178] sm:$0xff] %v70
    %327 = vst [vmem:[#allocation5 + $0x180] sm:$0xff] %v71
    %328 = vst [vmem:[#allocation5 + $0x188] sm:$0xff] %v72
    %329 = vst [vmem:[#allocation5 + $0x190] sm:$0xff] %v73
    %330 = vst [vmem:[#allocation5 + $0x198] sm:$0xff] %v74
    %331 = vst [vmem:[#allocation5 + $0x1a0] sm:$0xff] %v75
    %332 = vst [vmem:[#allocation5 + $0x1a8] sm:$0xff] %v76
    %333 = vst [vmem:[#allocation5 + $0x1b0] sm:$0xff] %v77
    %334 = vst [vmem:[#allocation5 + $0x1b8] sm:$0xff] %v78
    %335 = vst [vmem:[#allocation5 + $0x1c0] sm:$0xff] %v79
    %336 = vst [vmem:[#allocation5 + $0x1c8] sm:$0xff] %v80
    %337 = vst [vmem:[#allocation5 + $0x1d0] sm:$0xff] %v81
    %338 = vst [vmem:[#allocation5 + $0x1d8] sm:$0xff] %v82
    %339 = vst [vmem:[#allocation5 + $0x1e0] sm:$0xff] %v83
    %340 = vst [vmem:[#allocation5 + $0x1e8] sm:$0xff] %v84
    %341 = vst [vmem:[#allocation5 + $0x1f0] sm:$0xff] %v85
    %342 = vst [vmem:[#allocation5 + $0x1f8] sm:$0xff] %v86
    %343 = vst [vmem:[#allocation5 + $0x200] sm:$0xff] %v87
    %344 = vst [vmem:[#allocation5 + $0x208] sm:$0xff] %v88
    %345 = vst [vmem:[#allocation5 + $0x210] sm:$0xff] %v89
    %346 = vst [vmem:[#allocation5 + $0x218] sm:$0xff] %v90
    %347 = vst [vmem:[#allocation5 + $0x220] sm:$0xff] %v91
    %348 = vst [vmem:[#allocation5 + $0x228] sm:$0xff] %v92
    %349 = vst [vmem:[#allocation5 + $0x230] sm:$0xff] %v93
    %350 = vst [vmem:[#allocation5 + $0x238] sm:$0xff] %v94
    %351 = vst [vmem:[#allocation5 + $0x240] sm:$0xff] %v95
    %352 = vst [vmem:[#allocation5 + $0x248] sm:$0xff] %v96
    %353 = vst [vmem:[#allocation5 + $0x250] sm:$0xff] %v97
    %354 = vst [vmem:[#allocation5 + $0x258] sm:$0xff] %v98
    %355 = vst [vmem:[#allocation5 + $0x260] sm:$0xff] %v99
    %356 = vst [vmem:[#allocation5 + $0x268] sm:$0xff] %v100
    %357 = vst [vmem:[#allocation5 + $0x270] sm:$0xff] %v101
    %358 = vst [vmem:[#allocation5 + $0x278] sm:$0xff] %v102
    %359 = vst [vmem:[#allocation5 + $0x280] sm:$0xff] %v103
    %360 = vst [vmem:[#allocation5 + $0x288] sm:$0xff] %v104
    %361 = vst [vmem:[#allocation5 + $0x290] sm:$0xff] %v105
    %362 = vst [vmem:[#allocation5 + $0x298] sm:$0xff] %v106
    %363 = vst [vmem:[#allocation5 + $0x2a0] sm:$0xff] %v107
    %364 = vst [vmem:[#allocation5 + $0x2a8] sm:$0xff] %v108
    %365 = vst [vmem:[#allocation5 + $0x2b0] sm:$0xff] %v109
    %366 = vst [vmem:[#allocation5 + $0x2b8] sm:$0xff] %v110
    %367 = vst [vmem:[#allocation5 + $0x2c0] sm:$0xff] %v111
    %368 = vst [vmem:[#allocation5 + $0x2c8] sm:$0xff] %v112
    %369 = vst [vmem:[#allocation5 + $0x2d0] sm:$0xff] %v113
    %370 = vst [vmem:[#allocation5 + $0x2d8] sm:$0xff] %v114
    %371 = vst [vmem:[#allocation5 + $0x2e0] sm:$0xff] %v115
    %372 = vst [vmem:[#allocation5 + $0x2e8] sm:$0xff] %v116
    %373 = vst [vmem:[#allocation5 + $0x2f0] sm:$0xff] %v117
    %374 = vst [vmem:[#allocation5 + $0x2f8] sm:$0xff] %v118
    %375 = vst [vmem:[#allocation5 + $0x300] sm:$0xff] %v119
    %376 = vst [vmem:[#allocation5 + $0x308] sm:$0xff] %v120
    %377 = vst [vmem:[#allocation5 + $0x310] sm:$0xff] %v121
    %378 = vst [vmem:[#allocation5 + $0x318] sm:$0xff] %v122
    %379 = vst [vmem:[#allocation5 + $0x320] sm:$0xff] %v123
    %380 = vst [vmem:[#allocation5 + $0x328] sm:$0xff] %v124
    %381 = vst [vmem:[#allocation5 + $0x330] sm:$0xff] %v125
    %382 = vst [vmem:[#allocation5 + $0x338] sm:$0xff] %v126
    %383 = vst [vmem:[#allocation5 + $0x340] sm:$0xff] %v127
    %384 = vst [vmem:[#allocation5 + $0x348] sm:$0xff] %v128
    %385 = vst [vmem:[#allocation5 + $0x350] sm:$0xff] %v129
    %386 = vst [vmem:[#allocation5 + $0x358] sm:$0xff] %v130
    %387 = vst [vmem:[#allocation5 + $0x360] sm:$0xff] %v131
    %388 = vst [vmem:[#allocation5 + $0x368] sm:$0xff] %v132
    %389 = vst [vmem:[#allocation5 + $0x370] sm:$0xff] %v133
    %390 = vst [vmem:[#allocation5 + $0x378] sm:$0xff] %v134
    %391 = vst [vmem:[#allocation5 + $0x380] sm:$0xff] %v135
    %392 = vst [vmem:[#allocation5 + $0x388] sm:$0xff] %v136
    %393 = vst [vmem:[#allocation5 + $0x390] sm:$0xff] %v137
    %394 = vst [vmem:[#allocation5 + $0x398] sm:$0xff] %v138
    %395 = vst [vmem:[#allocation5 + $0x3a0] sm:$0xff] %v139
    %396 = vst [vmem:[#allocation5 + $0x3a8] sm:$0xff] %v140
    %397 = vst [vmem:[#allocation5 + $0x3b0] sm:$0xff] %v141
    %398 = vst [vmem:[#allocation5 + $0x3b8] sm:$0xff] %v142
    %399 = vst [vmem:[#allocation5 + $0x3c0] sm:$0xff] %v143
    %400 = vst [vmem:[#allocation5 + $0x3c8] sm:$0xff] %v144
    %401 = vst [vmem:[#allocation5 + $0x3d0] sm:$0xff] %v145
    %402 = vst [vmem:[#allocation5 + $0x3d8] sm:$0xff] %v146
    %403 = vst [vmem:[#allocation5 + $0x3e0] sm:$0xff] %v147
    %404 = vst [vmem:[#allocation5 + $0x3e8] sm:$0xff] %v148
    %405 = vst [vmem:[#allocation5 + $0x3f0] sm:$0xff] %v149
    %406 = vst [vmem:[#allocation5 + $0x3f8] sm:$0xff] %v150
    %407 = vst [vmem:[#allocation5 + $0x400] sm:$0xff] %v151
    %408 = vst [vmem:[#allocation5 + $0x408] sm:$0xff] %v152
    %409 = vst [vmem:[#allocation5 + $0x410] sm:$0xff] %v153
    %410 = vst [vmem:[#allocation5 + $0x418] sm:$0xff] %v154
    %411 = vst [vmem:[#allocation5 + $0x420] sm:$0xff] %v155
    %412 = vst [vmem:[#allocation5 + $0x428] sm:$0xff] %v156
    %413 = vst [vmem:[#allocation5 + $0x430] sm:$0xff] %v157
    %414 = vst [vmem:[#allocation5 + $0x438] sm:$0xff] %v158
    %415 = vst [vmem:[#allocation5 + $0x440] sm:$0xff] %v159
    %416 = vst [vmem:[#allocation5 + $0x448] sm:$0xff] %v160
    %417 = vst [vmem:[#allocation5 + $0x450] sm:$0xff] %v161
    %418 = vst [vmem:[#allocation5 + $0x458] sm:$0xff] %v162
    %419 = vst [vmem:[#allocation5 + $0x460] sm:$0xff] %v163
    %420 = vst [vmem:[#allocation5 + $0x468] sm:$0xff] %v164
    %421 = vst [vmem:[#allocation5 + $0x470] sm:$0xff] %v165
    %422 = vst [vmem:[#allocation5 + $0x478] sm:$0xff] %v166
    %423 = vst [vmem:[#allocation5 + $0x480] sm:$0xff] %v167
    %424 = vst [vmem:[#allocation5 + $0x488] sm:$0xff] %v168
    %425 = vst [vmem:[#allocation5 + $0x490] sm:$0xff] %v169
    %426 = vst [vmem:[#allocation5 + $0x498] sm:$0xff] %v170
    %427 = vst [vmem:[#allocation5 + $0x4a0] sm:$0xff] %v171
    %428 = vst [vmem:[#allocation5 + $0x4a8] sm:$0xff] %v172
    %429 = vst [vmem:[#allocation5 + $0x4b0] sm:$0xff] %v173
    %430 = vst [vmem:[#allocation5 + $0x4b8] sm:$0xff] %v174
    %431 = vst [vmem:[#allocation5 + $0x4c0] sm:$0xff] %v175
    %432 = vst [vmem:[#allocation5 + $0x4c8] sm:$0xff] %v176
    %433 = vst [vmem:[#allocation5 + $0x4d0] sm:$0xff] %v177
    %434 = vst [vmem:[#allocation5 + $0x4d8] sm:$0xff] %v178
    %435 = vst [vmem:[#allocation5 + $0x4e0] sm:$0xff] %v179
    %436 = vst [vmem:[#allocation5 + $0x4e8] sm:$0xff] %v180
    %437 = vst [vmem:[#allocation5 + $0x4f0] sm:$0xff] %v181
    %438 = vst [vmem:[#allocation5 + $0x4f8] sm:$0xff] %v182
    %439 = vst [vmem:[#allocation5 + $0x500] sm:$0xff] %v183
    %440 = vst [vmem:[#allocation5 + $0x508] sm:$0xff] %v184
    %441 = vst [vmem:[#allocation5 + $0x510] sm:$0xff] %v185
    %442 = vst [vmem:[#allocation5 + $0x518] sm:$0xff] %v186
    %443 = vst [vmem:[#allocation5 + $0x520] sm:$0xff] %v187
    %444 = vst [vmem:[#allocation5 + $0x528] sm:$0xff] %v188
    %445 = vst [vmem:[#allocation5 + $0x530] sm:$0xff] %v189
    %446 = vst [vmem:[#allocation5 + $0x538] sm:$0xff] %v190
    %447 = vst [vmem:[#allocation5 + $0x540] sm:$0xff] %v191
    %448 = vst [vmem:[#allocation5 + $0x548] sm:$0xff] %v192
    %449 = vst [vmem:[#allocation5 + $0x550] sm:$0xff] %v193
    %450 = vst [vmem:[#allocation5 + $0x558] sm:$0xff] %v194
    %451 = vst [vmem:[#allocation5 + $0x560] sm:$0xff] %v195
    %452 = vst [vmem:[#allocation5 + $0x568] sm:$0xff] %v196
    %453 = vst [vmem:[#allocation5 + $0x570] sm:$0xff] %v197
    %454 = vst [vmem:[#allocation5 + $0x578] sm:$0xff] %v198
    %455 = vst [vmem:[#allocation5 + $0x580] sm:$0xff] %v199
    %456 = vst [vmem:[#allocation5 + $0x588] sm:$0xff] %v200
    %457 = vst [vmem:[#allocation5 + $0x590] sm:$0xff] %v201
    %458 = vst [vmem:[#allocation5 + $0x598] sm:$0xff] %v202
    %459 = vst [vmem:[#allocation5 + $0x5a0] sm:$0xff] %v203
    %460 = vst [vmem:[#allocation5 + $0x5a8] sm:$0xff] %v204
    %461 = vst [vmem:[#allocation5 + $0x5b0] sm:$0xff] %v205
    %462 = vst [vmem:[#allocation5 + $0x5b8] sm:$0xff] %v206
    %463 = vst [vmem:[#allocation5 + $0x5c0] sm:$0xff] %v207
    %464 = vst [vmem:[#allocation5 + $0x5c8] sm:$0xff] %v208
    %465 = vst [vmem:[#allocation5 + $0x5d0] sm:$0xff] %v209
    %466 = vst [vmem:[#allocation5 + $0x5d8] sm:$0xff] %v210
    %467 = vst [vmem:[#allocation5 + $0x5e0] sm:$0xff] %v211
    %468 = vst [vmem:[#allocation5 + $0x5e8] sm:$0xff] %v212
    %469 = vst [vmem:[#allocation5 + $0x5f0] sm:$0xff] %v213
    %470 = vst [vmem:[#allocation5 + $0x5f8] sm:$0xff] %v214
    %471 = vst [vmem:[#allocation5 + $0x600] sm:$0xff] %v215
    %472 = vst [vmem:[#allocation5 + $0x608] sm:$0xff] %v216
    %473 = vst [vmem:[#allocation5 + $0x610] sm:$0xff] %v217
    %474 = vst [vmem:[#allocation5 + $0x618] sm:$0xff] %v218
    %475 = vst [vmem:[#allocation5 + $0x620] sm:$0xff] %v219
    %476 = vst [vmem:[#allocation5 + $0x628] sm:$0xff] %v220
    %477 = vst [vmem:[#allocation5 + $0x630] sm:$0xff] %v221
    %478 = vst [vmem:[#allocation5 + $0x638] sm:$0xff] %v222
    %479 = vst [vmem:[#allocation5 + $0x640] sm:$0xff] %v223
    %480 = vst [vmem:[#allocation5 + $0x648] sm:$0xff] %v224
    %481 = vst [vmem:[#allocation5 + $0x650] sm:$0xff] %v225
    %482 = vst [vmem:[#allocation5 + $0x658] sm:$0xff] %v226
    %483 = vst [vmem:[#allocation5 + $0x660] sm:$0xff] %v227
    %484 = vst [vmem:[#allocation5 + $0x668] sm:$0xff] %v228
    %485 = vst [vmem:[#allocation5 + $0x670] sm:$0xff] %v229
    %486 = vst [vmem:[#allocation5 + $0x678] sm:$0xff] %v230
    %487 = vst [vmem:[#allocation5 + $0x680] sm:$0xff] %v231
    %488 = vst [vmem:[#allocation5 + $0x688] sm:$0xff] %v232
    %489 = vst [vmem:[#allocation5 + $0x690] sm:$0xff] %v233
    %490 = vst [vmem:[#allocation5 + $0x698] sm:$0xff] %v234
    %491 = vst [vmem:[#allocation5 + $0x6a0] sm:$0xff] %v235
    %492 = vst [vmem:[#allocation5 + $0x6a8] sm:$0xff] %v236
    %493 = vst [vmem:[#allocation5 + $0x6b0] sm:$0xff] %v237
    %494 = vst [vmem:[#allocation5 + $0x6b8] sm:$0xff] %v238
    %495 = vst [vmem:[#allocation5 + $0x6c0] sm:$0xff] %v239
    %496 = vst [vmem:[#allocation5 + $0x6c8] sm:$0xff] %v240
    %497 = vst [vmem:[#allocation5 + $0x6d0] sm:$0xff] %v241
    %498 = vst [vmem:[#allocation5 + $0x6d8] sm:$0xff] %v242
    %499 = vst [vmem:[#allocation5 + $0x6e0] sm:$0xff] %v243
    %500 = vst [vmem:[#allocation5 + $0x6e8] sm:$0xff] %v244
    %501 = vst [vmem:[#allocation5 + $0x6f0] sm:$0xff] %v245
    %502 = vst [vmem:[#allocation5 + $0x6f8] sm:$0xff] %v246
    %503 = vst [vmem:[#allocation5 + $0x700] sm:$0xff] %v247
    %504 = vst [vmem:[#allocation5 + $0x708] sm:$0xff] %v248
    %505 = vst [vmem:[#allocation5 + $0x710] sm:$0xff] %v249
    %506 = vst [vmem:[#allocation5 + $0x718] sm:$0xff] %v250
    %507 = vst [vmem:[#allocation5 + $0x720] sm:$0xff] %v251
    %508 = vst [vmem:[#allocation5 + $0x728] sm:$0xff] %v252
    %509 = vst [vmem:[#allocation5 + $0x730] sm:$0xff] %v253
    %510 = vst [vmem:[#allocation5 + $0x738] sm:$0xff] %v254
    %511 = vst [vmem:[#allocation5 + $0x740] sm:$0xff] %v255
    %512 = vst [vmem:[#allocation5 + $0x748] sm:$0xff] %v256
    %513 = vst [vmem:[#allocation5 + $0x750] sm:$0xff] %v257
    %514 = vst [vmem:[#allocation5 + $0x758] sm:$0xff] %v258
    %515 = vst [vmem:[#allocation5 + $0x760] sm:$0xff] %v259
    %516 = vst [vmem:[#allocation5 + $0x768] sm:$0xff] %v260
    %517 = vst [vmem:[#allocation5 + $0x770] sm:$0xff] %v261
    %518 = vst [vmem:[#allocation5 + $0x778] sm:$0xff] %v262
    %519 = vst [vmem:[#allocation5 + $0x780] sm:$0xff] %v263
    %520 = vst [vmem:[#allocation5 + $0x788] sm:$0xff] %v264
    %521 = vst [vmem:[#allocation5 + $0x790] sm:$0xff] %v265
    %522 = vst [vmem:[#allocation5 + $0x798] sm:$0xff] %v266
    %523 = vst [vmem:[#allocation5 + $0x7a0] sm:$0xff] %v267
    %524 = vst [vmem:[#allocation5 + $0x7a8] sm:$0xff] %v268
    %525 = vst [vmem:[#allocation5 + $0x7b0] sm:$0xff] %v269
    %526 = vst [vmem:[#allocation5 + $0x7b8] sm:$0xff] %v270
    %527 = vst [vmem:[#allocation5 + $0x7c0] sm:$0xff] %v271
    %528 = vst [vmem:[#allocation5 + $0x7c8] sm:$0xff] %v272
    %529 = vst [vmem:[#allocation5 + $0x7d0] sm:$0xff] %v273
    %530 = vst [vmem:[#allocation5 + $0x7d8] sm:$0xff] %v274
    %531 = vst [vmem:[#allocation5 + $0x7e0] sm:$0xff] %v275
    %532 = vst [vmem:[#allocation5 + $0x7e8] sm:$0xff] %v276
    %533 = vst [vmem:[#allocation5 + $0x7f0] sm:$0xff] %v277
    %534 = vst [vmem:[#allocation5 + $0x7f8] sm:$0xff] %v278
    // Predicated region
    $region10: #{tpu_custom_call.1} parent=1 // pred_check
      _
    $region11: #{tpu_custom_call.1} parent=1 // pred_check_branch
      %536 = sbr.rel (0) target = $region13
    $region12: #{tpu_custom_call.1} parent=1 // pred_region
      %s538 = ssub.s32 32768, 32768
      %539 = vsyncadd [#allocation4], %s538
      %s540 = sshll.u32 [#allocation5], 4
      %s541 = int_to_ptr.vmem [resolvable:$true] %s540
      %546 = dma.vmem_to_hbm [thread:$0]  %s541, 32768, %s1, [#allocation4], 2048, 2048, 128
    $region13: #{tpu_custom_call.1} parent=1 // pred_fallthru
      _
    // Predicated region
    $region14: #{tpu_custom_call.1} parent=1 // pred_check
      _
    $region15: #{tpu_custom_call.1} parent=1 // pred_check_branch
      %548 = sbr.rel (0) target = $region17
    $region16: #{tpu_custom_call.1} parent=1 // pred_region
      %549 = dma.done [#allocation4], 32768
    $region17: #{tpu_custom_call.1} parent=1 // pred_fallthru
      _
    %550 = vsyncpa [#allocation3], 1
    %551 = vsyncpa [#allocation4], 1

</llo_original>
